<compile_context>
chip_gen: v5e
topology: v5e:2x2
jax: 0.10.0
libtpu: 0.0.40
codegen_flags: <defaults>
</compile_context>

<pallas_src>
from math import ceil
from typing import NamedTuple

import jax
import jax.numpy as jnp
from jax.experimental import pallas as pl
from jax.experimental.pallas import tpu as pltpu


N_GAUSSIANS = 3
OUT_LOGITS = N_GAUSSIANS                    # 3
OUT_MEANS = 3 * N_GAUSSIANS                 # 9
OUT_SIGMAS = 3 * N_GAUSSIANS                # 9
SIG_START = OUT_LOGITS + OUT_MEANS          # 12
SIG_END = SIG_START + OUT_SIGMAS            # 21
OUT_REAL = SIG_END                          # 21 real output columns
OUT_W = 32                                  # packed output slab width
LANE = 128

TM_CAP = 4096                               # max batch-tile rows
VMEM_DATA_BUDGET = 36 * 1024 * 1024         # target data footprint per step
VMEM_LIMIT_BYTES = 48 * 1024 * 1024         # scoped VMEM request (< v7x 64 MiB)


def _round_up(n, m):
    return ((n + m - 1) // m) * m


# ---------------------------------------------------------------------------
# Kernel
# ---------------------------------------------------------------------------
def _fused_gm_kernel(x_ref, w1_ref, b1_ref, w2_ref, b2_ref, out_ref, acc_ref):
    """Batch tile x K tile: accumulate hidden pre-act; finalize at last K."""
    k = pl.program_id(1)

    @pl.when(k == 0)
    def _init():
        acc_ref[...] = jnp.zeros_like(acc_ref)

    # Fused first layer (all three branches): accumulate over the D tiles.
    x = x_ref[...].astype(w1_ref.dtype)
    acc_ref[...] += jnp.dot(x, w1_ref[...], preferred_element_type=jnp.float32)

    @pl.when(k == pl.num_programs(1) - 1)
    def _finalize():
        # ReLU (dropout=None -> identity).
        h = jnp.maximum(acc_ref[...] + b1_ref[...], 0.0)
        # Fused block-diagonal second layer -> packed [TM, 32] slab.
        out = jnp.dot(h.astype(w2_ref.dtype), w2_ref[...],
                      preferred_element_type=jnp.float32) + b2_ref[...]
        # exp only on the sigma columns (12:21); [1, 32] mask broadcasts.
        col = jax.lax.broadcasted_iota(jnp.int32, (1, OUT_W), 1)
        sig_mask = (col >= SIG_START) & (col < SIG_END)
        out_ref[...] = jnp.where(sig_mask, jnp.exp(out), out)


# ---------------------------------------------------------------------------
# Param packing (done ONCE at init, not per forward call)
# ---------------------------------------------------------------------------
class PackedParams(NamedTuple):
    w1: jax.Array   # [D, h3_pad]        compute dtype
    b1: jax.Array   # [1, h3_pad]        float32
    w2: jax.Array   # [h3_pad, OUT_W]    compute dtype
    b2: jax.Array   # [1, OUT_W]         float32


def pack_params(params, input_size, compute_dtype=jnp.float32):
    """Pack per-branch weights into fused W1_cat / block-diagonal W2_blk."""
    hidden = ceil(input_size / 2)
    h3 = 3 * hidden
    h3_pad = _round_up(h3, LANE)

    # First layer: concatenate along output axis, pad lanes to 128k.
    w1_cat = jnp.concatenate(
        [params["w1_mix"], params["w1_mean"], params["w1_var"]], axis=1)
    b1_cat = jnp.concatenate(
        [params["b1_mix"], params["b1_mean"], params["b1_var"]], axis=1)
    w1_cat = jnp.pad(w1_cat, ((0, 0), (0, h3_pad - h3))).astype(compute_dtype)
    b1_cat = jnp.pad(b1_cat, ((0, 0), (0, h3_pad - h3))).astype(jnp.float32)

    # Second layer: block diagonal into a 32-lane-wide packed slab.
    w2_blk = jnp.zeros((h3_pad, OUT_W), jnp.float32)
    w2_blk = w2_blk.at[0:hidden, 0:OUT_LOGITS].set(params["w2_mix"])
    w2_blk = w2_blk.at[hidden:2 * hidden, OUT_LOGITS:SIG_START].set(params["w2_mean"])
    w2_blk = w2_blk.at[2 * hidden:h3, SIG_START:SIG_END].set(params["w2_var"])
    w2_blk = w2_blk.astype(compute_dtype)

    b2_cat = jnp.zeros((1, OUT_W), jnp.float32)
    b2_cat = b2_cat.at[:, 0:OUT_LOGITS].set(params["b2_mix"])
    b2_cat = b2_cat.at[:, OUT_LOGITS:SIG_START].set(params["b2_mean"])
    b2_cat = b2_cat.at[:, SIG_START:SIG_END].set(params["b2_var"])

    return PackedParams(w1_cat, b1_cat, w2_blk, b2_cat)


# ---------------------------------------------------------------------------
# Tile selection
# ---------------------------------------------------------------------------
def _choose_tk(d):
    """K (input-feature) tile: full D when small, else a 128-multiple divisor."""
    if d <= 1024:
        return d
    for cand in (1024, 512, 256, 128):
        if d % cand == 0:
            return cand
    return d  # not 128-divisible: fall back to full D (rare)


def _choose_tiles(batch, d, h3_pad, w_itemsize, x_itemsize):
    tk = _choose_tk(d)
    num_k = d // tk

    # VMEM footprint model (double-buffered pipeline buffers + acc scratch).
    fixed = (2 * tk * h3_pad * w_itemsize          # W1 tile buffers
             + 2 * h3_pad * OUT_W * w_itemsize     # W2
             + 2 * h3_pad * 4 + 2 * OUT_W * 4)     # b1, b2
    per_row = (2 * tk * x_itemsize                 # x tile buffers
               + 2 * OUT_W * 4                     # out tile buffers
               + h3_pad * 4)                       # f32 accumulator scratch
    avail = max(VMEM_DATA_BUDGET - fixed, per_row * 8)
    tm_cap = max(8, min(TM_CAP, (avail // per_row) // 8 * 8))

    # Minimize padding; keep >= 2 batch steps (when batch > 8) so the
    # "parallel" axis can shard across the two TensorCores on v7x.
    n_steps = max(pl.cdiv(batch, tm_cap), 2 if batch > 8 else 1)
    tm = _round_up(pl.cdiv(batch, n_steps), 8)
    return tm, tk, num_k


# ---------------------------------------------------------------------------
# Forward wrapper
# ---------------------------------------------------------------------------
def gaussian_mixture_forward(x, packed: PackedParams, *, tm=None):
    """x: [batch, input_size].  Returns (logits [B,3], means [B,9], sigmas [B,9])."""
    batch, d = x.shape
    w1, b1, w2, b2 = packed
    h3_pad = w1.shape[1]

    tm_auto, tk, num_k = _choose_tiles(
        batch, d, h3_pad,
        jnp.dtype(w1.dtype).itemsize, jnp.dtype(x.dtype).itemsize)
    if tm is None:
        tm = tm_auto
    else:
        tm = max(8, _round_up(tm, 8))

    batch_pad = _round_up(batch, tm)
    if batch_pad != batch:
        x = jnp.pad(x, ((0, batch_pad - batch), (0, 0)))
    grid = (batch_pad // tm, num_k)

    const_map = lambda i, k: (0, 0)   # resident weights/biases

    out = pl.pallas_call(
        _fused_gm_kernel,
        out_shape=jax.ShapeDtypeStruct((batch_pad, OUT_W), jnp.float32),
        grid_spec=pltpu.PrefetchScalarGridSpec(
            num_scalar_prefetch=0,
            grid=grid,
            in_specs=[
                pl.BlockSpec((tm, tk), lambda i, k: (i, k)),         # x tile
                pl.BlockSpec((tk, h3_pad), lambda i, k: (k, 0)),     # W1 tile
                pl.BlockSpec((1, h3_pad), const_map),                # b1
                pl.BlockSpec((h3_pad, OUT_W), const_map),            # W2
                pl.BlockSpec((1, OUT_W), const_map),                 # b2
            ],
            out_specs=pl.BlockSpec((tm, OUT_W), lambda i, k: (i, 0)),
            scratch_shapes=[pltpu.VMEM((tm, h3_pad), jnp.float32)],
        ),
        compiler_params=pltpu.CompilerParams(
            dimension_semantics=("parallel", "arbitrary"),
            vmem_limit_bytes=VMEM_LIMIT_BYTES),
    )(x, w1, b1, w2, b2)

    out = out[:batch]
    logits = out[:, 0:OUT_LOGITS]
    means = out[:, OUT_LOGITS:SIG_START]
    sigmas = out[:, SIG_START:SIG_END]
    return logits, means, sigmas


# ---------------------------------------------------------------------------
# Init + reference (pure JAX) for correctness check
# ---------------------------------------------------------------------------
def init_params(key, input_size):
    """Mirror torch.nn.Linear init (uniform +/- 1/sqrt(fan_in)).

    Weights stored as [in_features, out_features]; biases as [1, out_features].
    """
    hidden_size = ceil(input_size / 2)
    out3 = N_GAUSSIANS
    out9 = 3 * N_GAUSSIANS

    shapes = {
        "w1_mix": (input_size, hidden_size), "b1_mix": (1, hidden_size),
        "w2_mix": (hidden_size, out3), "b2_mix": (1, out3),
        "w1_mean": (input_size, hidden_size), "b1_mean": (1, hidden_size),
        "w2_mean": (hidden_size, out9), "b2_mean": (1, out9),
        "w1_var": (input_size, hidden_size), "b1_var": (1, hidden_size),
        "w2_var": (hidden_size, out9), "b2_var": (1, out9),
    }
    fan_ins = {
        "w1_mix": input_size, "b1_mix": input_size,
        "w2_mix": hidden_size, "b2_mix": hidden_size,
        "w1_mean": input_size, "b1_mean": input_size,
        "w2_mean": hidden_size, "b2_mean": hidden_size,
        "w1_var": input_size, "b1_var": input_size,
        "w2_var": hidden_size, "b2_var": hidden_size,
    }

    params = {}
    keys = jax.random.split(key, len(shapes))
    for k, (name, shape) in zip(keys, shapes.items()):
        bound = 1.0 / (fan_ins[name] ** 0.5)
        params[name] = jax.random.uniform(
            k, shape, dtype=jnp.float32, minval=-bound, maxval=bound)
    return params


def reference_forward(x, params):
    def mlp(w1, b1, w2, b2):
        h = jnp.maximum(x @ w1 + b1, 0.0)
        return h @ w2 + b2

    logits = mlp(params["w1_mix"], params["b1_mix"],
                 params["w2_mix"], params["b2_mix"])
    means = mlp(params["w1_mean"], params["b1_mean"],
                params["w2_mean"], params["b2_mean"])
    sigmas = jnp.exp(mlp(params["w1_var"], params["b1_var"],
                         params["w2_var"], params["b2_var"]))
    return logits, means, sigmas


if __name__ == "__main__":
    batch = 8
    input_size = 32   # -> hidden_size = 16

    key = jax.random.PRNGKey(0)
    key_x, key_p = jax.random.split(key)

    x = jax.random.normal(key_x, (batch, input_size), dtype=jnp.float32)
    params = init_params(key_p, input_size)

    # Weight packing hoisted out of the forward path: done once here.
    packed_f32 = pack_params(params, input_size, compute_dtype=jnp.float32)

    fwd = jax.jit(gaussian_mixture_forward)

    logits, means, sigmas = fwd(x, packed_f32)
    jax.block_until_ready((logits, means, sigmas))

    ref_logits, ref_means, ref_sigmas = reference_forward(x, params)
    assert logits.shape == (batch, N_GAUSSIANS)
    assert means.shape == (batch, 3 * N_GAUSSIANS)
    assert sigmas.shape == (batch, 3 * N_GAUSSIANS)
    assert jnp.allclose(logits, ref_logits, atol=1e-5, rtol=1e-5)
    assert jnp.allclose(means, ref_means, atol=1e-5, rtol=1e-5)
    assert jnp.allclose(sigmas, ref_sigmas, atol=1e-5, rtol=1e-5)

    # bf16 compute path (v6e/v7x MXU peak, half weight VMEM); looser tolerance.
    packed_bf16 = pack_params(params, input_size, compute_dtype=jnp.bfloat16)
    logits_b, means_b, sigmas_b = fwd(x, packed_bf16)
    jax.block_until_ready((logits_b, means_b, sigmas_b))
    assert jnp.allclose(logits_b, ref_logits, atol=5e-2, rtol=5e-2)
    assert jnp.allclose(means_b, ref_means, atol=5e-2, rtol=5e-2)
    assert jnp.allclose(sigmas_b, ref_sigmas, atol=5e-2, rtol=5e-2)

    print("KERNEL_OK")
</pallas_src>

<mosaic_0001>
module attributes {stable_mosaic.version = 11 : i64} {
  func.func @_fused_gm_kernel(%arg0: i32, %arg1: i32, %arg2: memref<8x32xf32, #tpu.memory_space<vmem>>, %arg3: memref<32x128xf32, #tpu.memory_space<vmem>>, %arg4: memref<1x128xf32, #tpu.memory_space<vmem>>, %arg5: memref<128x32xf32, #tpu.memory_space<vmem>>, %arg6: memref<1x32xf32, #tpu.memory_space<vmem>>, %arg7: memref<8x32xf32, #tpu.memory_space<vmem>>, %arg8: memref<8x128xf32, #tpu.memory_space<vmem>>) attributes {dimension_semantics = [#tpu.dimension_semantics<parallel>, #tpu.dimension_semantics<arbitrary>], iteration_bounds = array<i64: 1, 1>, scalar_prefetch = 0 : i64, scratch_operands = 1 : i64, tpu.core_type = #tpu.core_type<tc>, window_params = [{transform_indices = @transform_0, window_bounds = array<i64: 8, 32>}, {transform_indices = @transform_1, window_bounds = array<i64: 32, 128>}, {pipeline_mode = #tpu.pipeline_mode<synchronous>, transform_indices = @transform_2, window_bounds = array<i64: 1, 128>}, {pipeline_mode = #tpu.pipeline_mode<synchronous>, transform_indices = @transform_3, window_bounds = array<i64: 128, 32>}, {pipeline_mode = #tpu.pipeline_mode<synchronous>, transform_indices = @transform_4, window_bounds = array<i64: 1, 32>}, {transform_indices = @transform_5, window_bounds = array<i64: 8, 32>}]} {
    %c0_i32 = arith.constant 0 : i32
    %0 = arith.cmpi eq, %arg1, %c0_i32 : i32
    %1 = arith.extui %0 : i1 to i32
    %c0_i32_0 = arith.constant 0 : i32
    %2 = arith.cmpi ne, %1, %c0_i32_0 : i32
    scf.if %2 {
      %cst_10 = arith.constant 0.000000e+00 : f32
      %12 = vector.broadcast %cst_10 : f32 to vector<8x128xf32>
      %c0_11 = arith.constant 0 : index
      %c0_12 = arith.constant 0 : index
      %13 = vector.load %arg8[%c0_11, %c0_12] : memref<8x128xf32, #tpu.memory_space<vmem>>, vector<8x128xf32>
      tpu.vector_store %arg8[%c0_11, %c0_12], %12 {strides = array<i32>} : memref<8x128xf32, #tpu.memory_space<vmem>>, vector<8x128xf32>,
    } else {
    }
    %c0 = arith.constant 0 : index
    %c0_1 = arith.constant 0 : index
    %3 = vector.load %arg2[%c0, %c0_1] : memref<8x32xf32, #tpu.memory_space<vmem>>, vector<8x32xf32>
    %c0_2 = arith.constant 0 : index
    %c0_3 = arith.constant 0 : index
    %4 = vector.load %arg8[%c0_2, %c0_3] : memref<8x128xf32, #tpu.memory_space<vmem>>, vector<8x128xf32>
    %c0_4 = arith.constant 0 : index
    %c0_5 = arith.constant 0 : index
    %5 = vector.load %arg3[%c0_4, %c0_5] : memref<32x128xf32, #tpu.memory_space<vmem>>, vector<32x128xf32>
    %cst = arith.constant dense<0.000000e+00> : vector<8x128xf32>
    %6 = tpu.matmul %3, %5, %cst {dimension_numbers = #tpu.dot_dimension_numbers<[1], [0], [0], [1], [0, 0, 1, 1], [], []>} : vector<8x32xf32>, vector<32x128xf32>, vector<8x128xf32> -> vector<8x128xf32>
    %7 = arith.addf %4, %6 : vector<8x128xf32>
    %c0_6 = arith.constant 0 : index
    %c0_7 = arith.constant 0 : index
    %8 = vector.load %arg8[%c0_6, %c0_7] : memref<8x128xf32, #tpu.memory_space<vmem>>, vector<8x128xf32>
    tpu.vector_store %arg8[%c0_6, %c0_7], %7 {strides = array<i32>} : memref<8x128xf32, #tpu.memory_space<vmem>>, vector<8x128xf32>,
    %c0_i32_8 = arith.constant 0 : i32
    %9 = arith.cmpi eq, %arg1, %c0_i32_8 : i32
    %10 = arith.extui %9 : i1 to i32
    %c0_i32_9 = arith.constant 0 : i32
    %11 = arith.cmpi ne, %10, %c0_i32_9 : i32
    scf.if %11 {
      %c0_10 = arith.constant 0 : index
      %c0_11 = arith.constant 0 : index
      %12 = vector.load %arg8[%c0_10, %c0_11] : memref<8x128xf32, #tpu.memory_space<vmem>>, vector<8x128xf32>
      %c0_12 = arith.constant 0 : index
      %c0_13 = arith.constant 0 : index
      %13 = vector.load %arg4[%c0_12, %c0_13] : memref<1x128xf32, #tpu.memory_space<vmem>>, vector<1x128xf32>
      %14 = vector.broadcast %13 : vector<1x128xf32> to vector<8x128xf32>
      %15 = arith.addf %12, %14 : vector<8x128xf32>
      %cst_14 = arith.constant 0.000000e+00 : f32
      %16 = vector.broadcast %cst_14 : f32 to vector<8x128xf32>
      %17 = arith.maximumf %15, %16 : vector<8x128xf32>
      %c0_15 = arith.constant 0 : index
      %c0_16 = arith.constant 0 : index
      %18 = vector.load %arg5[%c0_15, %c0_16] : memref<128x32xf32, #tpu.memory_space<vmem>>, vector<128x32xf32>
      %cst_17 = arith.constant dense<0.000000e+00> : vector<8x32xf32>
      %19 = tpu.matmul %17, %18, %cst_17 {dimension_numbers = #tpu.dot_dimension_numbers<[1], [0], [0], [1], [0, 0, 1, 1], [], []>} : vector<8x128xf32>, vector<128x32xf32>, vector<8x32xf32> -> vector<8x32xf32>
      %c0_18 = arith.constant 0 : index
      %c0_19 = arith.constant 0 : index
      %20 = vector.load %arg6[%c0_18, %c0_19] : memref<1x32xf32, #tpu.memory_space<vmem>>, vector<1x32xf32>
      %21 = vector.broadcast %20 : vector<1x32xf32> to vector<8x32xf32>
      %22 = arith.addf %19, %21 : vector<8x32xf32>
      %23 = tpu.iota {dimensions = array<i32: 1>} : vector<1x32xi32>
      %c12_i32 = arith.constant 12 : i32
      %24 = vector.broadcast %c12_i32 : i32 to vector<1x32xi32>
      %25 = arith.cmpi sge, %23, %24 : vector<1x32xi32>
      %c21_i32 = arith.constant 21 : i32
      %26 = vector.broadcast %c21_i32 : i32 to vector<1x32xi32>
      %27 = arith.cmpi slt, %23, %26 : vector<1x32xi32>
      %28 = arith.andi %25, %27 : vector<1x32xi1>
      %29 = math.exp %22 : vector<8x32xf32>
      %30 = vector.shape_cast %28 : vector<1x32xi1> to vector<1x32xi1>
      %31 = vector.broadcast %30 : vector<1x32xi1> to vector<8x32xi1>
      %32 = arith.select %31, %29, %22 : vector<8x32xi1>, vector<8x32xf32>
      %c0_20 = arith.constant 0 : index
      %c0_21 = arith.constant 0 : index
      %33 = vector.load %arg7[%c0_20, %c0_21] : memref<8x32xf32, #tpu.memory_space<vmem>>, vector<8x32xf32>
      tpu.vector_store %arg7[%c0_20, %c0_21], %32 {strides = array<i32>} : memref<8x32xf32, #tpu.memory_space<vmem>>, vector<8x32xf32>,
    } else {
    }
    return
  }
  func.func @transform_0(%arg0: i32, %arg1: i32) -> (i32, i32) {
    %c0_i32 = arith.constant 0 : i32
    return %arg0, %arg1 : i32, i32
  }
  func.func @transform_1(%arg0: i32, %arg1: i32) -> (i32, i32) {
    %c0_i32 = arith.constant 0 : i32
    %c0_i32_0 = arith.constant 0 : i32
    return %arg1, %c0_i32 : i32, i32
  }
  func.func @transform_2(%arg0: i32, %arg1: i32) -> (i32, i32) {
    %c0_i32 = arith.constant 0 : i32
    %c0_i32_0 = arith.constant 0 : i32
    %c0_i32_1 = arith.constant 0 : i32
    return %c0_i32, %c0_i32_0 : i32, i32
  }
  func.func @transform_3(%arg0: i32, %arg1: i32) -> (i32, i32) {
    %c0_i32 = arith.constant 0 : i32
    %c0_i32_0 = arith.constant 0 : i32
    %c0_i32_1 = arith.constant 0 : i32
    return %c0_i32, %c0_i32_0 : i32, i32
  }
  func.func @transform_4(%arg0: i32, %arg1: i32) -> (i32, i32) {
    %c0_i32 = arith.constant 0 : i32
    %c0_i32_0 = arith.constant 0 : i32
    %c0_i32_1 = arith.constant 0 : i32
    return %c0_i32, %c0_i32_0 : i32, i32
  }
  func.func @transform_5(%arg0: i32, %arg1: i32) -> (i32, i32) {
    %c0_i32 = arith.constant 0 : i32
    %c0_i32_0 = arith.constant 0 : i32
    return %arg0, %c0_i32 : i32, i32
  }
}

</mosaic_0001>

<llo_original>
// kernel: gaussian_mixture_forward.1
$region0: #{gaussian_mixture_forward.1}
  #allocation0 [shape = 'u32[]', space=smem, size = 0x4, offset = 0x4, fixed_abs, tag = 'smem constant byte address 0x4 - core index']
  #allocation1 [shape = 'u32[72,128]{1,0:T(1,128)}', space=vmem, size = 0x9000, scoped, tag = 'internal scratch']
  #allocation2 [shape = 'f32[8,128]{1,0:T(8,128)}', space=vmem, size = 0x1000, scoped, tag = 'scratch operand']
  %s0 = inlined_call_operand.vmem [shape: f32[8,32], index: 0, kind: input, shape index: {}]
  %s1 = inlined_call_operand.vmem [shape: f32[32,128], index: 1, kind: input, shape index: {}]
  %s2 = inlined_call_operand.vmem [shape: f32[1,128], index: 2, kind: input, shape index: {}]
  %s3 = inlined_call_operand.vmem [shape: f32[128,32], index: 3, kind: input, shape index: {}]
  %s4 = inlined_call_operand.vmem [shape: f32[1,32], index: 4, kind: input, shape index: {}]
  %s5 = inlined_call_operand.vmem [shape: f32[8,32], index: 5, kind: output, shape index: {}]
  %s6 = sld [smem:[#allocation0]]
  $region38: #{gaussian_mixture_forward.1} parent=0
    _
  %s8 = ssub.s32 1, %s6
  %s9 = scalar_select 0, %s8, %s6
  // Predicated region
  $region2: #{gaussian_mixture_forward.1} parent=0 // pred_check
    _
  $region3: #{gaussian_mixture_forward.1} parent=0 // pred_check_branch
    %11 = sbr.rel (0) target = $region5
  $region4: #{gaussian_mixture_forward.1} parent=0 // pred_region
    _
  $region5: #{gaussian_mixture_forward.1} parent=0 // pred_fallthru
    _
  // Predicated region
  $region6: #{gaussian_mixture_forward.1} parent=0 // pred_check
    _
  $region7: #{gaussian_mixture_forward.1} parent=0 // pred_check_branch
    %13 = sbr.rel (0) target = $region9
  $region8: #{gaussian_mixture_forward.1} parent=0 // pred_region
    _
  $region9: #{gaussian_mixture_forward.1} parent=0 // pred_fallthru
    _
  // Predicated region
  $region10: #{gaussian_mixture_forward.1} parent=0 // pred_check
    _
  $region11: #{gaussian_mixture_forward.1} parent=0 // pred_check_branch
    %15 = sbr.rel (0) target = $region13
  $region12: #{gaussian_mixture_forward.1} parent=0 // pred_region
    _
  $region13: #{gaussian_mixture_forward.1} parent=0 // pred_fallthru
    _
  // Predicated region
  $region14: #{gaussian_mixture_forward.1} parent=0 // pred_check
    _
  $region15: #{gaussian_mixture_forward.1} parent=0 // pred_check_branch
    %17 = sbr.rel (0) target = $region17
  $region16: #{gaussian_mixture_forward.1} parent=0 // pred_region
    _
  $region17: #{gaussian_mixture_forward.1} parent=0 // pred_fallthru
    _
  // Predicated region
  $region18: #{gaussian_mixture_forward.1} parent=0 // pred_check
    _
  $region19: #{gaussian_mixture_forward.1} parent=0 // pred_check_branch
    %19 = sbr.rel (0) target = $region21
  $region20: #{gaussian_mixture_forward.1} parent=0 // pred_region
    _
  $region21: #{gaussian_mixture_forward.1} parent=0 // pred_fallthru
    _
  %p20 = scmp.eq.s32.totalorder 0, 0
  // Predicated region
  $region22: #{gaussian_mixture_forward.1} parent=0 // pred_check
    %p21 = pneg %p20
  $region23: #{gaussian_mixture_forward.1} parent=0 // pred_check_branch
    %23 = sbr.rel (%p21) target = $region25
  $region24: #{gaussian_mixture_forward.1} parent=0 // pred_region
    %24 = vst [vmem:[#allocation2] sm:$0xff] 0.0
  $region25: #{gaussian_mixture_forward.1} parent=0 // pred_fallthru
    _
  %v25 = vld [vmem:[%s0] sm:$0xff]
  %v26 = vld [vmem:[#allocation2] sm:$0xff]
  %v27 = vld [vmem:[%s1] sm:$0xff]
  %v28 = vld [vmem:[%s1 + $0x8] sm:$0xff]
  %v29 = vld [vmem:[%s1 + $0x10] sm:$0xff]
  %v30 = vld [vmem:[%s1 + $0x18] sm:$0xff]
  %vm31 = vcmask 261120
  %v33 = vsel %vm31, %v25, 0
  %35 = vmatpush.msra.mxu0 0.0
  %36 = vmatpush.msra.mxu0 0.0
  %37 = vmatpush.msra.mxu0 0.0
  %38 = vmatpush.msra.mxu0 0.0
  %39 = vmatpush.msra.mxu0 0.0
  %40 = vmatpush.msra.mxu0 0.0
  %41 = vmatpush.msra.mxu0 0.0
  %42 = vmatpush.msra.mxu0 0.0
  %43 = vmatpush.msra.mxu0 0.0
  %44 = vmatpush.msra.mxu0 0.0
  %45 = vmatpush.msra.mxu0 0.0
  %46 = vmatpush.msra.mxu0 0.0
  %47 = vmatpush.msra.mxu0 %v30
  %48 = vmatpush.msra.mxu0 %v29
  %49 = vmatpush.msra.mxu0 %v28
  %50 = vmatpush.msra.mxu0 %v27
  %51 = vmatmul.f32.gmra.mxu0 %v33
  %v52 = vpop.f32.mrf.mxu0
  %v53 = vadd.f32 0.0, %v52
  %54 = vdwg.mxu0
  %v55 = vadd.f32 %v26, %v53
  %56 = vst [vmem:[#allocation2] sm:$0xff] %v55
  // Predicated region
  $region26: #{gaussian_mixture_forward.1} parent=0 // pred_check
    %p57 = pneg %p20
  $region27: #{gaussian_mixture_forward.1} parent=0 // pred_check_branch
    %59 = sbr.rel (%p57) target = $region29
  $region28: #{gaussian_mixture_forward.1} parent=0 // pred_region
    %v60 = vld [vmem:[#allocation2] sm:$0xff]
    %v61 = vld [vmem:[%s2] sm:$0x1]
    %v63 = vperm.slane %v61, 0
    %v65 = vadd.f32 %v60, %v63
    %v66 = vmax.f32 %v65, 0.0
    %v67 = vld [vmem:[%s3] sm:$0xff]
    %v68 = vld [vmem:[%s3 + $0x8] sm:$0xff]
    %v69 = vld [vmem:[%s3 + $0x10] sm:$0xff]
    %v70 = vld [vmem:[%s3 + $0x18] sm:$0xff]
    %v71 = vld [vmem:[%s3 + $0x20] sm:$0xff]
    %v72 = vld [vmem:[%s3 + $0x28] sm:$0xff]
    %v73 = vld [vmem:[%s3 + $0x30] sm:$0xff]
    %v74 = vld [vmem:[%s3 + $0x38] sm:$0xff]
    %v75 = vld [vmem:[%s3 + $0x40] sm:$0xff]
    %v76 = vld [vmem:[%s3 + $0x48] sm:$0xff]
    %v77 = vld [vmem:[%s3 + $0x50] sm:$0xff]
    %v78 = vld [vmem:[%s3 + $0x58] sm:$0xff]
    %v79 = vld [vmem:[%s3 + $0x60] sm:$0xff]
    %v80 = vld [vmem:[%s3 + $0x68] sm:$0xff]
    %v81 = vld [vmem:[%s3 + $0x70] sm:$0xff]
    %v82 = vld [vmem:[%s3 + $0x78] sm:$0xff]
    %v83 = vld [vmem:[%s4] sm:$0x1]
    %v85 = vperm.slane %v83, 0
    %87 = vmatpush.msra.mxu0 %v82
    %88 = vmatpush.msra.mxu0 %v81
    %89 = vmatpush.msra.mxu0 %v80
    %90 = vmatpush.msra.mxu0 %v79
    %91 = vmatpush.msra.mxu0 %v78
    %92 = vmatpush.msra.mxu0 %v77
    %93 = vmatpush.msra.mxu0 %v76
    %94 = vmatpush.msra.mxu0 %v75
    %95 = vmatpush.msra.mxu0 %v74
    %96 = vmatpush.msra.mxu0 %v73
    %97 = vmatpush.msra.mxu0 %v72
    %98 = vmatpush.msra.mxu0 %v71
    %99 = vmatpush.msra.mxu0 %v70
    %100 = vmatpush.msra.mxu0 %v69
    %101 = vmatpush.msra.mxu0 %v68
    %102 = vmatpush.msra.mxu0 %v67
    %103 = vmatmul.f32.gmra.mxu0 %v66
    %v104 = vpop.f32.mrf.mxu0
    %v105 = vadd.f32 %v85, %v104
    %106 = vdwg.mxu0
    %v107 = vlaneseq
    %v108 = vand.u32 %v107, 127
    %vm109 = vcmp.ge.s32.totalorder %v108, 12
    %vm110 = vcmp.lt.s32.totalorder %v108, 21
    %vm111 = vmand %vm109, %vm110
    %v112 = vmul.f32 %v105, 1.442695
    %v113 = vpow.pop %v112
    %v114 = vsel %vm111, 1, 0
    %vm115 = vcmp.eq.s32.totalorder %v114, 1
    %v116 = vsel %vm115, %v113, %v105
    %117 = vst.msk [vmem:[%s5] sm:$0xff] %vm31, %v116
  $region29: #{gaussian_mixture_forward.1} parent=0 // pred_fallthru
    _
  // Predicated region
  $region30: #{gaussian_mixture_forward.1} parent=0 // pred_check
    _
  $region31: #{gaussian_mixture_forward.1} parent=0 // pred_check_branch
    %119 = sbr.rel (0) target = $region33
  $region32: #{gaussian_mixture_forward.1} parent=0 // pred_region
    _
  $region33: #{gaussian_mixture_forward.1} parent=0 // pred_fallthru
    _
  // Predicated region
  $region34: #{gaussian_mixture_forward.1} parent=0 // pred_check
    _
  $region35: #{gaussian_mixture_forward.1} parent=0 // pred_check_branch
    %121 = sbr.rel (0) target = $region37
  $region36: #{gaussian_mixture_forward.1} parent=0 // pred_region
    _
  $region37: #{gaussian_mixture_forward.1} parent=0 // pred_fallthru
    _

</llo_original>
